<compile_context>
chip_gen: v6e
topology: v6e:2x2x1
jax: 0.10.0
libtpu: 0.0.40
codegen_flags: <defaults>
</compile_context>

<pallas_src>
import functools

import jax
import jax.numpy as jnp
from jax import lax
from jax.experimental import pallas as pl
from jax.experimental.pallas import tpu as pltpu


def _round_up(v, n):
    return -(-v // n) * n


def _residual_linear_kernel(x_ref, w_ref, b_ref, o_ref, *,
                            input_factor, tn, grid_n):
    # x_ref : (TM, Hp)  rows of flattened (batch*seq, hidden_padded)
    # w_ref : (TN, Hp)  nn.Linear weight tile, (out, in) layout, pre-scaled
    # b_ref : (1, TN)   pre-scaled bias tile
    # o_ref : (TM, TN)
    x = x_ref[...]

    # Inner module (nn.Linear): y = x @ W.T, contracted against W's last
    # (in) dim directly -> no transposed HBM copy of the weight is needed.
    y = lax.dot_general(
        x, w_ref[...],
        dimension_numbers=(((1,), (1,)), ((), ())),
        preferred_element_type=jnp.float32,
    )
    y = y + b_ref[...].astype(jnp.float32)

    # Residual slice of x matching this output-column tile.
    if grid_n == 1:
        x_res = x
    else:
        start = pl.multiple_of(pl.program_id(1) * tn, tn)
        x_res = x_ref[:, pl.ds(start, tn)]
    x_res = x_res.astype(jnp.float32)
    if input_factor != 1.0:               # static Python branch (trace time)
        x_res = x_res * input_factor

    # module_factor is already folded into w/b, so epilogue is a single add.
    o_ref[...] = (y + x_res).astype(o_ref.dtype)


def residual_connection_linear(x, weight, bias,
                               module_factor=1.0, input_factor=1.0,
                               vmem_budget_bytes=24 * 1024 * 1024):
    """outputs = (x @ weight.T + bias) * module_factor + x * input_factor

    x      : (batch, seq, hidden)
    weight : (hidden, hidden)   -- PyTorch nn.Linear weight, (out, in) layout
    bias   : (hidden,)
    """
    b, s, h = x.shape
    assert weight.shape == (h, h) and bias.shape == (h,)
    m = b * s

    # Fold module_factor into the Linear parameters (one-time O(H^2) scale,
    # removes an O(M*H) VPU multiply from the kernel epilogue).
    w = (weight * module_factor).astype(weight.dtype)
    bvec = (bias * module_factor).astype(bias.dtype)

    # Lane-dense hidden: pad H to a multiple of 128 (and of the N tile when
    # N is tiled).  Zero padding keeps the math exact; padded cols sliced off.
    tn_cap = 2048
    h_pad = _round_up(h, 128)
    if h_pad > tn_cap:
        h_pad = _round_up(h_pad, tn_cap)
    tn = min(h_pad, tn_cap)
    grid_n = h_pad // tn

    x2 = x.reshape(m, h)
    if h_pad != h:
        x2 = jnp.pad(x2, ((0, 0), (0, h_pad - h)))
        w = jnp.pad(w, ((0, h_pad - h), (0, h_pad - h)))
        bvec = jnp.pad(bvec, ((0, h_pad - h),))
    b2 = bvec.reshape(1, h_pad)

    # Pick the M tile: as large as possible (big tiles reach 85%+ of the HBM
    # roofline) while double-buffered x/out/weight tiles fit the VMEM budget.
    x_bytes = jnp.dtype(x.dtype).itemsize
    w_bytes = jnp.dtype(w.dtype).itemsize
    sub = max(8, 32 // x_bytes)                  # 8 (f32) / 16 (bf16) rows
    w_tile_bytes = 2 * tn * h_pad * w_bytes
    row_bytes = 2 * h_pad * x_bytes + 2 * tn * x_bytes
    tm = (vmem_budget_bytes - w_tile_bytes) // row_bytes
    tm = max(sub, (tm // sub) * sub)
    tm = min(tm, 1024, _round_up(m, sub))
    grid_m = pl.cdiv(m, tm)

    kernel = functools.partial(_residual_linear_kernel,
                               input_factor=float(input_factor),
                               tn=tn, grid_n=grid_n)

    out = pl.pallas_call(
        kernel,
        out_shape=jax.ShapeDtypeStruct((m, h_pad), x.dtype),
        grid_spec=pltpu.PrefetchScalarGridSpec(
            num_scalar_prefetch=0,
            grid=(grid_m, grid_n),
            in_specs=[
                pl.BlockSpec((tm, h_pad), lambda i, j: (i, 0)),   # x rows
                pl.BlockSpec((tn, h_pad), lambda i, j: (j, 0)),   # weight tile
                pl.BlockSpec((1, tn), lambda i, j: (0, j)),       # bias tile
            ],
            out_specs=pl.BlockSpec((tm, tn), lambda i, j: (i, j)),
        ),
        compiler_params=pltpu.CompilerParams(
            # Both grid axes are independent (no accumulator) -> parallel,
            # so v7x can shard across its 2 TensorCores.
            dimension_semantics=("parallel", "parallel"),
            vmem_limit_bytes=32 * 1024 * 1024,
        ),
    )(x2, w, b2)

    if h_pad != h:
        out = out[:, :h]
    return out.reshape(b, s, h)


if __name__ == "__main__":
    batch, seq, hidden = 2, 8, 32
    key = jax.random.PRNGKey(0)
    kx, kw, kb = jax.random.split(key, 3)

    x = jax.random.normal(kx, (batch, seq, hidden), dtype=jnp.float32)
    # Deterministic synthetic parameters for the inner nn.Linear(hidden, hidden)
    weight = jax.random.normal(kw, (hidden, hidden), dtype=jnp.float32) * 0.05
    bias = jax.random.normal(kb, (hidden,), dtype=jnp.float32) * 0.01

    module_factor, input_factor = 0.5, 1.0
    out = residual_connection_linear(x, weight, bias,
                                     module_factor=module_factor,
                                     input_factor=input_factor)
    out = jax.block_until_ready(out)

    # Reference check in plain JAX
    ref = (x @ weight.T + bias) * module_factor + x * input_factor
    assert jnp.allclose(out, ref, atol=1e-5, rtol=1e-5), "mismatch vs reference"

    print("KERNEL_OK")
</pallas_src>

<mosaic_0001>
module attributes {stable_mosaic.version = 11 : i64} {
  func.func @_residual_linear_kernel(%arg0: i32, %arg1: i32, %arg2: memref<16x128xf32, #tpu.memory_space<vmem>>, %arg3: memref<128x128xf32, #tpu.memory_space<vmem>>, %arg4: memref<1x128xf32, #tpu.memory_space<vmem>>, %arg5: memref<16x128xf32, #tpu.memory_space<vmem>>) attributes {dimension_semantics = [#tpu.dimension_semantics<parallel>, #tpu.dimension_semantics<parallel>], iteration_bounds = array<i64: 1, 1>, scalar_prefetch = 0 : i64, scratch_operands = 0 : i64, tpu.core_type = #tpu.core_type<tc>, window_params = [{transform_indices = @transform_0, window_bounds = array<i64: 16, 128>}, {transform_indices = @transform_1, window_bounds = array<i64: 128, 128>}, {transform_indices = @transform_2, window_bounds = array<i64: 1, 128>}, {transform_indices = @transform_3, window_bounds = array<i64: 16, 128>}]} {
    %c0 = arith.constant 0 : index
    %c0_0 = arith.constant 0 : index
    %0 = vector.load %arg2[%c0, %c0_0] : memref<16x128xf32, #tpu.memory_space<vmem>>, vector<16x128xf32>
    %c0_1 = arith.constant 0 : index
    %c0_2 = arith.constant 0 : index
    %1 = vector.load %arg3[%c0_1, %c0_2] : memref<128x128xf32, #tpu.memory_space<vmem>>, vector<128x128xf32>
    %cst = arith.constant dense<0.000000e+00> : vector<16x128xf32>
    %2 = tpu.matmul %0, %1, %cst {dimension_numbers = #tpu.dot_dimension_numbers<[1], [1], [0], [0], [0, 0, 1, 0], [], []>} : vector<16x128xf32>, vector<128x128xf32>, vector<16x128xf32> -> vector<16x128xf32>
    %c0_3 = arith.constant 0 : index
    %c0_4 = arith.constant 0 : index
    %3 = vector.load %arg4[%c0_3, %c0_4] : memref<1x128xf32, #tpu.memory_space<vmem>>, vector<1x128xf32>
    %4 = vector.broadcast %3 : vector<1x128xf32> to vector<16x128xf32>
    %5 = arith.addf %2, %4 : vector<16x128xf32>
    %6 = arith.addf %5, %0 : vector<16x128xf32>
    %c0_5 = arith.constant 0 : index
    %c0_6 = arith.constant 0 : index
    %7 = vector.load %arg5[%c0_5, %c0_6] : memref<16x128xf32, #tpu.memory_space<vmem>>, vector<16x128xf32>
    tpu.vector_store %arg5[%c0_5, %c0_6], %6 {strides = array<i32>} : memref<16x128xf32, #tpu.memory_space<vmem>>, vector<16x128xf32>,
    return
  }
  func.func @transform_0(%arg0: i32, %arg1: i32) -> (i32, i32) {
    %c0_i32 = arith.constant 0 : i32
    %c0_i32_0 = arith.constant 0 : i32
    return %arg0, %c0_i32 : i32, i32
  }
  func.func @transform_1(%arg0: i32, %arg1: i32) -> (i32, i32) {
    %c0_i32 = arith.constant 0 : i32
    %c0_i32_0 = arith.constant 0 : i32
    return %arg1, %c0_i32 : i32, i32
  }
  func.func @transform_2(%arg0: i32, %arg1: i32) -> (i32, i32) {
    %c0_i32 = arith.constant 0 : i32
    %c0_i32_0 = arith.constant 0 : i32
    return %c0_i32, %arg1 : i32, i32
  }
  func.func @transform_3(%arg0: i32, %arg1: i32) -> (i32, i32) {
    %c0_i32 = arith.constant 0 : i32
    return %arg0, %arg1 : i32, i32
  }
}

</mosaic_0001>

<llo_original>
// kernel: tpu_custom_call.1
$region0: #{tpu_custom_call.1}
  #allocation0 [shape = 'u32[]', space=smem, size = 0x4, offset = 0x4, fixed_abs, tag = 'smem constant byte address 0x4 - core index']
  #allocation1 [shape = 'u32[144,128]{1,0:T(1,128)}', space=vmem, size = 0x12000, scoped, tag = 'internal scratch']
  %s0 = inlined_call_operand.hbm [shape: f32[16,128], index: 0, kind: input, shape index: {}]
  %s1 = inlined_call_operand.hbm [shape: f32[128,128], index: 1, kind: input, shape index: {}]
  %s2 = inlined_call_operand.vmem [shape: f32[1,128], index: 2, kind: input, shape index: {}]
  %s3 = inlined_call_operand.hbm [shape: f32[16,128], index: 3, kind: output, shape index: {}]
  %s4 = sld [smem:[#allocation0]]
  $region30: #{tpu_custom_call.1} parent=0
    _
  %s6 = ssub.s32 1, %s4
  %s7 = scalar_select 0, %s6, %s4
  $region1: #{tpu_custom_call.1} parent=0
    #allocation2 [shape = 'u8[8192]{0}', space=vmem, size = 0x2000, scoped, tag = 'input window, operand 0, single buffered']
    #allocation3 [shape = 's32[1]{0}', space=sflag, size = 0x4, scoped, tag = 'scoped memory for tpu_custom_call.1']
    #allocation4 [shape = 's32[1]{0}', space=sflag, size = 0x4, scoped, tag = 'scoped memory for tpu_custom_call.1']
    #allocation5 [shape = 'u8[65536]{0}', space=vmem, size = 0x10000, scoped, tag = 'input window, operand 1, single buffered']
    #allocation6 [shape = 's32[1]{0}', space=sflag, size = 0x4, scoped, tag = 'scoped memory for tpu_custom_call.1']
    #allocation7 [shape = 'u8[8192]{0}', space=vmem, size = 0x2000, scoped, tag = 'output window, operand 0, single buffered']
    %8 = vsyncpa [#allocation3], 0
    %9 = vsyncpa [#allocation6], 0
    %10 = vsyncpa [#allocation4], 0
    // Predicated region
    $region2: #{tpu_custom_call.1} parent=1 // pred_check
      _
    $region3: #{tpu_custom_call.1} parent=1 // pred_check_branch
      %12 = sbr.rel (0) target = $region5
    $region4: #{tpu_custom_call.1} parent=1 // pred_region
      %s14 = ssub.s32 256, 256
      %15 = vsyncadd [#allocation3], %s14
      %s16 = sshll.u32 [#allocation2], 4
      %s17 = int_to_ptr.vmem [resolvable:$true] %s16
      %22 = dma.hbm_to_vmem [thread:$0]  %s0, 256, %s17, [#allocation3], 128, 128, 8
    $region5: #{tpu_custom_call.1} parent=1 // pred_fallthru
      _
    // Predicated region
    $region6: #{tpu_custom_call.1} parent=1 // pred_check
      _
    $region7: #{tpu_custom_call.1} parent=1 // pred_check_branch
      %24 = sbr.rel (0) target = $region9
    $region8: #{tpu_custom_call.1} parent=1 // pred_region
      %s26 = ssub.s32 2048, 2048
      %27 = vsyncadd [#allocation6], %s26
      %s28 = sshll.u32 [#allocation5], 4
      %s29 = int_to_ptr.vmem [resolvable:$true] %s28
      %34 = dma.hbm_to_vmem [thread:$0]  %s1, 2048, %s29, [#allocation6], 128, 128, 8
    $region9: #{tpu_custom_call.1} parent=1 // pred_fallthru
      _
    // Predicated region
    $region10: #{tpu_custom_call.1} parent=1 // pred_check
      _
    $region11: #{tpu_custom_call.1} parent=1 // pred_check_branch
      %36 = sbr.rel (0) target = $region13
    $region12: #{tpu_custom_call.1} parent=1 // pred_region
      _
    $region13: #{tpu_custom_call.1} parent=1 // pred_fallthru
      _
    // Predicated region
    $region14: #{tpu_custom_call.1} parent=1 // pred_check
      _
    $region15: #{tpu_custom_call.1} parent=1 // pred_check_branch
      %38 = sbr.rel (0) target = $region17
    $region16: #{tpu_custom_call.1} parent=1 // pred_region
      %39 = dma.done [#allocation3], 256
    $region17: #{tpu_custom_call.1} parent=1 // pred_fallthru
      _
    // Predicated region
    $region18: #{tpu_custom_call.1} parent=1 // pred_check
      _
    $region19: #{tpu_custom_call.1} parent=1 // pred_check_branch
      %41 = sbr.rel (0) target = $region21
    $region20: #{tpu_custom_call.1} parent=1 // pred_region
      %42 = dma.done [#allocation6], 2048
    $region21: #{tpu_custom_call.1} parent=1 // pred_fallthru
      _
    %v43 = vld [vmem:[#allocation2] sm:$0xff]
    %v44 = vld [vmem:[#allocation2 + $0x8] sm:$0xff]
    %v45 = vld [vmem:[#allocation5] sm:$0xff]
    %v46 = vld [vmem:[#allocation5 + $0x8] sm:$0xff]
    %v47 = vld [vmem:[#allocation5 + $0x10] sm:$0xff]
    %v48 = vld [vmem:[#allocation5 + $0x18] sm:$0xff]
    %v49 = vld [vmem:[#allocation5 + $0x20] sm:$0xff]
    %v50 = vld [vmem:[#allocation5 + $0x28] sm:$0xff]
    %v51 = vld [vmem:[#allocation5 + $0x30] sm:$0xff]
    %v52 = vld [vmem:[#allocation5 + $0x38] sm:$0xff]
    %v53 = vld [vmem:[#allocation5 + $0x40] sm:$0xff]
    %v54 = vld [vmem:[#allocation5 + $0x48] sm:$0xff]
    %v55 = vld [vmem:[#allocation5 + $0x50] sm:$0xff]
    %v56 = vld [vmem:[#allocation5 + $0x58] sm:$0xff]
    %v57 = vld [vmem:[#allocation5 + $0x60] sm:$0xff]
    %v58 = vld [vmem:[#allocation5 + $0x68] sm:$0xff]
    %v59 = vld [vmem:[#allocation5 + $0x70] sm:$0xff]
    %v60 = vld [vmem:[#allocation5 + $0x78] sm:$0xff]
    %v61 = vld [vmem:[%s2] sm:$0x1]
    %v63 = vlaneseq
    %v64 = vshrl.u32 %v63, 7
    %v65 = vsub.s32 0, %v64
    %v66 = vrot.slane %v61, %v65
    %68 = vmatprep.subr.mxu0 0.0
    %69 = vmatpush1.xpose.msra.mxu0 %v60
    %70 = vmatprep.subr.mxu0 0.0
    %71 = vmatpush1.xpose.msra.mxu0 %v59
    %72 = vmatprep.subr.mxu0 0.0
    %73 = vmatpush1.xpose.msra.mxu0 %v58
    %74 = vmatprep.subr.mxu0 0.0
    %75 = vmatpush1.xpose.msra.mxu0 %v57
    %76 = vmatprep.subr.mxu0 0.0
    %77 = vmatpush1.xpose.msra.mxu0 %v56
    %78 = vmatprep.subr.mxu0 0.0
    %79 = vmatpush1.xpose.msra.mxu0 %v55
    %80 = vmatprep.subr.mxu0 0.0
    %81 = vmatpush1.xpose.msra.mxu0 %v54
    %82 = vmatprep.subr.mxu0 0.0
    %83 = vmatpush1.xpose.msra.mxu0 %v53
    %84 = vmatprep.subr.mxu0 0.0
    %85 = vmatpush1.xpose.msra.mxu0 %v52
    %86 = vmatprep.subr.mxu0 0.0
    %87 = vmatpush1.xpose.msra.mxu0 %v51
    %88 = vmatprep.subr.mxu0 0.0
    %89 = vmatpush1.xpose.msra.mxu0 %v50
    %90 = vmatprep.subr.mxu0 0.0
    %91 = vmatpush1.xpose.msra.mxu0 %v49
    %92 = vmatprep.subr.mxu0 0.0
    %93 = vmatpush1.xpose.msra.mxu0 %v48
    %94 = vmatprep.subr.mxu0 0.0
    %95 = vmatpush1.xpose.msra.mxu0 %v47
    %96 = vmatprep.subr.mxu0 0.0
    %97 = vmatpush1.xpose.msra.mxu0 %v46
    %98 = vmatprep.subr.mxu0 0.0
    %99 = vmatpush1.xpose.msra.mxu0 %v45
    %100 = vmatprep.subr.mxu0 0.0
    %101 = vmatpush2.xpose.msra.mxu0 0.0
    %102 = vmatprep.subr.mxu0 0.0
    %103 = vmatpush2.xpose.msra.mxu0 0.0
    %104 = vmatprep.subr.mxu0 0.0
    %105 = vmatpush2.xpose.msra.mxu0 0.0
    %106 = vmatprep.subr.mxu0 0.0
    %107 = vmatpush2.xpose.msra.mxu0 0.0
    %108 = vmatprep.subr.mxu0 0.0
    %109 = vmatpush2.xpose.msra.mxu0 0.0
    %110 = vmatprep.subr.mxu0 0.0
    %111 = vmatpush2.xpose.msra.mxu0 0.0
    %112 = vmatprep.subr.mxu0 0.0
    %113 = vmatpush2.xpose.msra.mxu0 0.0
    %114 = vmatprep.subr.mxu0 0.0
    %115 = vmatpush2.xpose.msra.mxu0 0.0
    %116 = vmatprep.subr.mxu0 0.0
    %117 = vmatpush2.xpose.msra.mxu0 0.0
    %118 = vmatprep.subr.mxu0 0.0
    %119 = vmatpush2.xpose.msra.mxu0 0.0
    %120 = vmatprep.subr.mxu0 0.0
    %121 = vmatpush2.xpose.msra.mxu0 0.0
    %122 = vmatprep.subr.mxu0 0.0
    %123 = vmatpush2.xpose.msra.mxu0 0.0
    %124 = vmatprep.subr.mxu0 0.0
    %125 = vmatpush2.xpose.msra.mxu0 0.0
    %126 = vmatprep.subr.mxu0 0.0
    %127 = vmatpush2.xpose.msra.mxu0 0.0
    %128 = vmatprep.subr.mxu0 0.0
    %129 = vmatpush2.xpose.msra.mxu0 0.0
    %130 = vmatprep.subr.mxu0 0.0
    %131 = vmatpush2.xpose.msra.mxu0 0.0
    %132 = vmatprep.mubr.f32.mxu0 0.0
    %133 = vmatmul.mubr.f32.gmra.mxu0 %v43
    %v134 = vpop.f32.mrf.mxu0
    %v135 = vadd.f32 %v66, %v134
    %v136 = vpop.f32.mrf.mxu0
    %137 = vmatprep.mubr.f32.mxu0 0.0
    %138 = vmatmul.mubr.f32.gmra.mxu0 %v44
    %v139 = vpop.f32.mrf.mxu0
    %v140 = vadd.f32 %v66, %v139
    %v141 = vpop.f32.mrf.mxu0
    %142 = vdwg.mxu0
    %v143 = vadd.f32 %v135, %v43
    %v144 = vadd.f32 %v140, %v44
    %145 = vst [vmem:[#allocation7] sm:$0xff] %v143
    %146 = vst [vmem:[#allocation7 + $0x8] sm:$0xff] %v144
    // Predicated region
    $region22: #{tpu_custom_call.1} parent=1 // pred_check
      _
    $region23: #{tpu_custom_call.1} parent=1 // pred_check_branch
      %148 = sbr.rel (0) target = $region25
    $region24: #{tpu_custom_call.1} parent=1 // pred_region
      %s150 = ssub.s32 256, 256
      %151 = vsyncadd [#allocation4], %s150
      %s152 = sshll.u32 [#allocation7], 4
      %s153 = int_to_ptr.vmem [resolvable:$true] %s152
      %158 = dma.vmem_to_hbm [thread:$0]  %s153, 256, %s3, [#allocation4], 128, 128, 8
    $region25: #{tpu_custom_call.1} parent=1 // pred_fallthru
      _
    // Predicated region
    $region26: #{tpu_custom_call.1} parent=1 // pred_check
      _
    $region27: #{tpu_custom_call.1} parent=1 // pred_check_branch
      %160 = sbr.rel (0) target = $region29
    $region28: #{tpu_custom_call.1} parent=1 // pred_region
      %161 = dma.done [#allocation4], 256
    $region29: #{tpu_custom_call.1} parent=1 // pred_fallthru
      _
    %162 = vsyncpa [#allocation3], 1
    %163 = vsyncpa [#allocation6], 1
    %164 = vsyncpa [#allocation4], 1

</llo_original>
